<compile_context>
chip_gen: v7x
topology: tpu7x:2x2x1
jax: 0.10.0
libtpu: 0.0.40
codegen_flags: <defaults>
</compile_context>

<pallas_src>
import functools

import jax
import jax.numpy as jnp
from jax.experimental import pallas as pl
from jax.experimental.pallas import tpu as pltpu


def _round_up(v, m):
    return ((v + m - 1) // m) * m


def _cdiv(a, b):
    return (a + b - 1) // b


# --------------------------------------------------------------------------
# Kernels
# --------------------------------------------------------------------------
def _robust_scaler_kernel(x_ref, scale_ref, scaled_ref, *, epsilon, chunks):
    # x_ref:      (TILE_B, T) f32 VMEM
    # scale_ref:  (TILE_B, 1) f32 VMEM
    # scaled_ref: (TILE_B, T) f32 VMEM
    tile_b = x_ref.shape[0]
    zero_col = jnp.zeros((tile_b, 1), dtype=jnp.float32)

    # ---- pass 1a: per-row sum and non-zero count of the raw series ----
    # Zeros contribute nothing to the sum, so only the count needs the mask.
    sum_x, cnt = zero_col, zero_col
    for s0, sz in chunks:
        xc = x_ref[:, s0:s0 + sz]
        sum_x = sum_x + jnp.sum(xc, axis=1, keepdims=True)
        cnt = cnt + jnp.sum((xc != 0.0).astype(jnp.float32), axis=1, keepdims=True)
    inv_cnt = 1.0 / jnp.maximum(cnt, 1.0)
    mean = sum_x * inv_cnt                      # all-zero rows -> mean = 0

    # ---- pass 1b: two-pass variance over the non-zero entries ----
    ss = zero_col
    for s0, sz in chunks:
        xc = x_ref[:, s0:s0 + sz]
        d = xc - mean
        ss = ss + jnp.sum(jnp.where(xc != 0.0, d * d, 0.0), axis=1, keepdims=True)
    std = jnp.sqrt(ss * inv_cnt)
    upper = mean + 2.0 * std                    # (TILE_B, 1), broadcasts over T

    # ---- pass 2a: sum / non-zero count of clip(x, 0, upper) ----
    sum_c, cnt2 = zero_col, zero_col
    for s0, sz in chunks:
        cc = jnp.minimum(jnp.maximum(x_ref[:, s0:s0 + sz], 0.0), upper)
        sum_c = sum_c + jnp.sum(cc, axis=1, keepdims=True)
        cnt2 = cnt2 + jnp.sum((cc != 0.0).astype(jnp.float32), axis=1, keepdims=True)
    inv_cnt2 = 1.0 / jnp.maximum(cnt2, 1.0)
    mean_c = sum_c * inv_cnt2

    # ---- pass 2b: two-pass variance of the clipped non-zero entries ----
    ss_c = zero_col
    for s0, sz in chunks:
        cc = jnp.minimum(jnp.maximum(x_ref[:, s0:s0 + sz], 0.0), upper)
        d = cc - mean_c
        ss_c = ss_c + jnp.sum(jnp.where(cc != 0.0, d * d, 0.0), axis=1, keepdims=True)
    std_c = jnp.sqrt(ss_c * inv_cnt2)

    # ---- final scale and scaled output ----
    s = mean_c + std_c + epsilon                # (TILE_B, 1)
    scale_ref[...] = s
    inv_s = pl.reciprocal(s, approx=False)      # one reciprocal per row
    for s0, sz in chunks:
        scaled_ref[:, s0:s0 + sz] = jnp.minimum(
            jnp.maximum(x_ref[:, s0:s0 + sz] * inv_s, 0.0), 3.0)


def _max_scaler_kernel(x_ref, scale_ref, scaled_ref, *, epsilon, chunks):
    tile_b = x_ref.shape[0]
    m = jnp.full((tile_b, 1), -jnp.inf, dtype=jnp.float32)
    for s0, sz in chunks:
        m = jnp.maximum(m, jnp.max(x_ref[:, s0:s0 + sz], axis=1, keepdims=True))
    s = m + epsilon
    scale_ref[...] = s
    inv_s = pl.reciprocal(s, approx=False)
    for s0, sz in chunks:
        scaled_ref[:, s0:s0 + sz] = x_ref[:, s0:s0 + sz] * inv_s


# --------------------------------------------------------------------------
# Wrapper (CustomScaling.forward equivalent)
# --------------------------------------------------------------------------
@functools.partial(jax.jit, static_argnums=(1, 2))
def custom_scaling(history_channels, epsilon, method="robust"):
    """JAX/Pallas equivalent of CustomScaling(method).forward.

    history_channels: (B, T, 1) float32
    epsilon: python float (static)
    returns: (scale (B, 1, 1), scaled (B, T, 1))
    """
    B, T, C = history_channels.shape
    assert C == 1, "CustomScaling expects a single channel"
    # Trailing unit-dim reshape is a bitcast under jit: no extra HBM traffic.
    x2d = jnp.reshape(history_channels.astype(jnp.float32), (B, T))

    # ---- tile over B; T stays whole in the block (no host-side padding) ----
    target_block_bytes = 512 * 1024
    if B <= 8:
        tile_b = B                                     # full-dim block, always legal
    else:
        tile_b = max(8, (target_block_bytes // (4 * T)) // 8 * 8)
        tile_b = min(tile_b, 512)
        if B >= 16:
            # Keep >= 2 grid tiles so both v7x TensorCores get work.
            tile_b = min(tile_b, _round_up(_cdiv(B, 2), 8))
        tile_b = min(tile_b, _round_up(B, 8))
    b_tiles = max(1, _cdiv(B, tile_b))

    # In-kernel lane-chunking: bound per-chunk working set (~256 KiB of f32).
    chunk_elems = 64 * 1024
    t_chunk = max(128, (chunk_elems // max(tile_b, 1)) // 128 * 128)
    chunks = tuple((s0, min(t_chunk, T - s0)) for s0 in range(0, T, t_chunk))

    if method == "robust":
        kernel_fn = _robust_scaler_kernel
    elif method == "max":
        kernel_fn = _max_scaler_kernel
    else:
        raise ValueError(f"Unknown scaling method: {method}")

    kernel = functools.partial(kernel_fn, epsilon=float(epsilon), chunks=chunks)

    scale2d, scaled2d = pl.pallas_call(
        kernel,
        out_shape=(
            jax.ShapeDtypeStruct((B, 1), jnp.float32),
            jax.ShapeDtypeStruct((B, T), jnp.float32),
        ),
        grid=(b_tiles,),
        in_specs=[pl.BlockSpec((tile_b, T), lambda i: (i, 0))],
        out_specs=(
            pl.BlockSpec((tile_b, 1), lambda i: (i, 0)),
            pl.BlockSpec((tile_b, T), lambda i: (i, 0)),
        ),
        compiler_params=pltpu.CompilerParams(
            dimension_semantics=("parallel",),
            vmem_limit_bytes=32 * 1024 * 1024,
        ),
    )(x2d)

    scale = jnp.reshape(scale2d, (B, 1, 1))
    scaled = jnp.reshape(scaled2d, (B, T, 1))
    return scale, scaled


# --------------------------------------------------------------------------
# Pure-JAX reference mirroring the PyTorch per-batch loop (RobustScaler)
# --------------------------------------------------------------------------
def _robust_scaler_ref(x, epsilon):
    B, T, _ = x.shape
    xs = x[..., 0]
    scales, scaleds = [], []
    for b in range(B):
        series = xs[b]
        nz = series != 0.0
        cnt = jnp.sum(nz)
        mean = jnp.where(
            cnt > 0, jnp.sum(jnp.where(nz, series, 0.0)) / jnp.maximum(cnt, 1), 0.0)
        var = jnp.where(
            cnt > 0,
            jnp.sum(jnp.where(nz, (series - mean) ** 2, 0.0)) / jnp.maximum(cnt, 1),
            0.0)
        std = jnp.sqrt(var)
        upper = mean + 2.0 * std
        clipped = jnp.clip(series, 0.0, upper)
        nz2 = clipped != 0.0
        cnt2 = jnp.sum(nz2)
        mean2 = jnp.where(
            cnt2 > 0, jnp.sum(jnp.where(nz2, clipped, 0.0)) / jnp.maximum(cnt2, 1), 0.0)
        var2 = jnp.where(
            cnt2 > 0,
            jnp.sum(jnp.where(nz2, (clipped - mean2) ** 2, 0.0)) / jnp.maximum(cnt2, 1),
            0.0)
        std2 = jnp.sqrt(var2)
        s = mean2 + std2 + epsilon
        scales.append(s)
        scaleds.append(jnp.clip(series / s, 0.0, 3.0))
    return (jnp.stack(scales).reshape(B, 1, 1),
            jnp.stack(scaleds).reshape(B, T, 1))


if __name__ == "__main__":
    key = jax.random.PRNGKey(0)
    B, T = 4, 24
    x = jax.random.normal(key, (B, T, 1), dtype=jnp.float32) * 2.0 + 1.0
    # Exact zeros exercise the "ignore missing values" path.
    x = x.at[0, 2, 0].set(0.0)
    x = x.at[1, 5, 0].set(0.0)
    # One all-zero series exercises the empty / scale==epsilon path.
    x = x.at[2, :, 0].set(0.0)
    epsilon = 1e-6

    # --- robust (default) path ---
    scale, scaled = custom_scaling(x, epsilon, "robust")
    jax.block_until_ready((scale, scaled))
    scale_ref, scaled_ref = _robust_scaler_ref(x, epsilon)
    assert scale.shape == (B, 1, 1) and scaled.shape == (B, T, 1)
    assert jnp.allclose(scale, scale_ref, atol=1e-5, rtol=1e-5)
    assert jnp.allclose(scaled, scaled_ref, atol=1e-5, rtol=1e-5)

    # --- max path ---
    mscale, mscaled = custom_scaling(x, epsilon, "max")
    jax.block_until_ready((mscale, mscaled))
    mscale_ref = jnp.max(x, axis=1, keepdims=True) + epsilon
    mscaled_ref = x / mscale_ref
    assert jnp.allclose(mscale, mscale_ref, atol=1e-5, rtol=1e-5)
    assert jnp.allclose(mscaled, mscaled_ref, atol=1e-5, rtol=1e-5)

    print("KERNEL_OK")
</pallas_src>

<mosaic_0001>
module attributes {stable_mosaic.version = 11 : i64} {
  func.func @_robust_scaler_kernel(%arg0: i32, %arg1: memref<4x24xf32, #tpu.memory_space<vmem>>, %arg2: memref<4x1xf32, #tpu.memory_space<vmem>>, %arg3: memref<4x24xf32, #tpu.memory_space<vmem>>) attributes {dimension_semantics = [#tpu.dimension_semantics<parallel>], iteration_bounds = array<i64: 1>, scalar_prefetch = 0 : i64, scratch_operands = 0 : i64, tpu.core_type = #tpu.core_type<tc>, window_params = [{transform_indices = @transform_0, window_bounds = array<i64: 4, 24>}, {transform_indices = @transform_1, window_bounds = array<i64: 4, 1>}, {transform_indices = @transform_2, window_bounds = array<i64: 4, 24>}]} {
    %cst = arith.constant 0.000000e+00 : f32
    %0 = vector.broadcast %cst : f32 to vector<4x1xf32>
    %c0 = arith.constant 0 : index
    %c0_0 = arith.constant 0 : index
    %1 = vector.load %arg1[%c0, %c0_0] : memref<4x24xf32, #tpu.memory_space<vmem>>, vector<4x24xf32>
    %cst_1 = arith.constant dense<0.000000e+00> : vector<4xf32>
    %2 = vector.multi_reduction <add>, %1, %cst_1 [1] : vector<4x24xf32> to vector<4xf32>
    %3 = vector.shape_cast %2 : vector<4xf32> to vector<4x1xf32>
    %4 = arith.addf %0, %3 : vector<4x1xf32>
    %cst_2 = arith.constant 0.000000e+00 : f32
    %5 = vector.broadcast %cst_2 : f32 to vector<4x24xf32>
    %6 = arith.cmpf one, %1, %5 : vector<4x24xf32>
    %7 = arith.extui %6 : vector<4x24xi1> to vector<4x24xi32>
    %8 = arith.sitofp %7 : vector<4x24xi32> to vector<4x24xf32>
    %cst_3 = arith.constant dense<0.000000e+00> : vector<4xf32>
    %9 = vector.multi_reduction <add>, %8, %cst_3 [1] : vector<4x24xf32> to vector<4xf32>
    %10 = vector.shape_cast %9 : vector<4xf32> to vector<4x1xf32>
    %11 = arith.addf %0, %10 : vector<4x1xf32>
    %cst_4 = arith.constant 1.000000e+00 : f32
    %12 = vector.broadcast %cst_4 : f32 to vector<4x1xf32>
    %13 = arith.maximumf %11, %12 : vector<4x1xf32>
    %cst_5 = arith.constant 1.000000e+00 : f32
    %14 = vector.broadcast %cst_5 : f32 to vector<4x1xf32>
    %15 = arith.divf %14, %13 : vector<4x1xf32>
    %16 = arith.mulf %4, %15 : vector<4x1xf32>
    %c0_6 = arith.constant 0 : index
    %c0_7 = arith.constant 0 : index
    %17 = vector.load %arg1[%c0_6, %c0_7] : memref<4x24xf32, #tpu.memory_space<vmem>>, vector<4x24xf32>
    %18 = vector.broadcast %16 : vector<4x1xf32> to vector<4x24xf32>
    %19 = arith.subf %17, %18 : vector<4x24xf32>
    %cst_8 = arith.constant 0.000000e+00 : f32
    %20 = vector.broadcast %cst_8 : f32 to vector<4x24xf32>
    %21 = arith.cmpf one, %17, %20 : vector<4x24xf32>
    %22 = arith.mulf %19, %19 : vector<4x24xf32>
    %cst_9 = arith.constant 0.000000e+00 : f32
    %23 = vector.broadcast %cst_9 : f32 to vector<4x24xf32>
    %24 = arith.select %21, %22, %23 : vector<4x24xi1>, vector<4x24xf32>
    %cst_10 = arith.constant dense<0.000000e+00> : vector<4xf32>
    %25 = vector.multi_reduction <add>, %24, %cst_10 [1] : vector<4x24xf32> to vector<4xf32>
    %26 = vector.shape_cast %25 : vector<4xf32> to vector<4x1xf32>
    %27 = arith.addf %0, %26 : vector<4x1xf32>
    %28 = arith.mulf %27, %15 : vector<4x1xf32>
    %29 = math.sqrt %28 : vector<4x1xf32>
    %cst_11 = arith.constant 2.000000e+00 : f32
    %30 = vector.broadcast %cst_11 : f32 to vector<4x1xf32>
    %31 = arith.mulf %30, %29 : vector<4x1xf32>
    %32 = arith.addf %16, %31 : vector<4x1xf32>
    %c0_12 = arith.constant 0 : index
    %c0_13 = arith.constant 0 : index
    %33 = vector.load %arg1[%c0_12, %c0_13] : memref<4x24xf32, #tpu.memory_space<vmem>>, vector<4x24xf32>
    %cst_14 = arith.constant 0.000000e+00 : f32
    %34 = vector.broadcast %cst_14 : f32 to vector<4x24xf32>
    %35 = arith.maximumf %33, %34 : vector<4x24xf32>
    %36 = vector.broadcast %32 : vector<4x1xf32> to vector<4x24xf32>
    %37 = arith.minimumf %35, %36 : vector<4x24xf32>
    %cst_15 = arith.constant dense<0.000000e+00> : vector<4xf32>
    %38 = vector.multi_reduction <add>, %37, %cst_15 [1] : vector<4x24xf32> to vector<4xf32>
    %39 = vector.shape_cast %38 : vector<4xf32> to vector<4x1xf32>
    %40 = arith.addf %0, %39 : vector<4x1xf32>
    %cst_16 = arith.constant 0.000000e+00 : f32
    %41 = vector.broadcast %cst_16 : f32 to vector<4x24xf32>
    %42 = arith.cmpf one, %37, %41 : vector<4x24xf32>
    %43 = arith.extui %42 : vector<4x24xi1> to vector<4x24xi32>
    %44 = arith.sitofp %43 : vector<4x24xi32> to vector<4x24xf32>
    %cst_17 = arith.constant dense<0.000000e+00> : vector<4xf32>
    %45 = vector.multi_reduction <add>, %44, %cst_17 [1] : vector<4x24xf32> to vector<4xf32>
    %46 = vector.shape_cast %45 : vector<4xf32> to vector<4x1xf32>
    %47 = arith.addf %0, %46 : vector<4x1xf32>
    %cst_18 = arith.constant 1.000000e+00 : f32
    %48 = vector.broadcast %cst_18 : f32 to vector<4x1xf32>
    %49 = arith.maximumf %47, %48 : vector<4x1xf32>
    %cst_19 = arith.constant 1.000000e+00 : f32
    %50 = vector.broadcast %cst_19 : f32 to vector<4x1xf32>
    %51 = arith.divf %50, %49 : vector<4x1xf32>
    %52 = arith.mulf %40, %51 : vector<4x1xf32>
    %c0_20 = arith.constant 0 : index
    %c0_21 = arith.constant 0 : index
    %53 = vector.load %arg1[%c0_20, %c0_21] : memref<4x24xf32, #tpu.memory_space<vmem>>, vector<4x24xf32>
    %cst_22 = arith.constant 0.000000e+00 : f32
    %54 = vector.broadcast %cst_22 : f32 to vector<4x24xf32>
    %55 = arith.maximumf %53, %54 : vector<4x24xf32>
    %56 = vector.broadcast %32 : vector<4x1xf32> to vector<4x24xf32>
    %57 = arith.minimumf %55, %56 : vector<4x24xf32>
    %58 = vector.broadcast %52 : vector<4x1xf32> to vector<4x24xf32>
    %59 = arith.subf %57, %58 : vector<4x24xf32>
    %cst_23 = arith.constant 0.000000e+00 : f32
    %60 = vector.broadcast %cst_23 : f32 to vector<4x24xf32>
    %61 = arith.cmpf one, %57, %60 : vector<4x24xf32>
    %62 = arith.mulf %59, %59 : vector<4x24xf32>
    %cst_24 = arith.constant 0.000000e+00 : f32
    %63 = vector.broadcast %cst_24 : f32 to vector<4x24xf32>
    %64 = arith.select %61, %62, %63 : vector<4x24xi1>, vector<4x24xf32>
    %cst_25 = arith.constant dense<0.000000e+00> : vector<4xf32>
    %65 = vector.multi_reduction <add>, %64, %cst_25 [1] : vector<4x24xf32> to vector<4xf32>
    %66 = vector.shape_cast %65 : vector<4xf32> to vector<4x1xf32>
    %67 = arith.addf %0, %66 : vector<4x1xf32>
    %68 = arith.mulf %67, %51 : vector<4x1xf32>
    %69 = math.sqrt %68 : vector<4x1xf32>
    %70 = arith.addf %52, %69 : vector<4x1xf32>
    %cst_26 = arith.constant 9.99999997E-7 : f32
    %71 = vector.broadcast %cst_26 : f32 to vector<4x1xf32>
    %72 = arith.addf %70, %71 : vector<4x1xf32>
    %c0_27 = arith.constant 0 : index
    %c0_28 = arith.constant 0 : index
    %73 = vector.load %arg2[%c0_27, %c0_28] : memref<4x1xf32, #tpu.memory_space<vmem>>, vector<4x1xf32>
    tpu.vector_store %arg2[%c0_27, %c0_28], %72 {strides = array<i32>} : memref<4x1xf32, #tpu.memory_space<vmem>>, vector<4x1xf32>,
    %74 = tpu.reciprocal %72 : vector<4x1xf32> -> vector<4x1xf32>
    %c0_29 = arith.constant 0 : index
    %c0_30 = arith.constant 0 : index
    %75 = vector.load %arg1[%c0_29, %c0_30] : memref<4x24xf32, #tpu.memory_space<vmem>>, vector<4x24xf32>
    %76 = vector.broadcast %74 : vector<4x1xf32> to vector<4x24xf32>
    %77 = arith.mulf %75, %76 : vector<4x24xf32>
    %cst_31 = arith.constant 0.000000e+00 : f32
    %78 = vector.broadcast %cst_31 : f32 to vector<4x24xf32>
    %79 = arith.maximumf %77, %78 : vector<4x24xf32>
    %cst_32 = arith.constant 3.000000e+00 : f32
    %80 = vector.broadcast %cst_32 : f32 to vector<4x24xf32>
    %81 = arith.minimumf %79, %80 : vector<4x24xf32>
    %c0_33 = arith.constant 0 : index
    %c0_34 = arith.constant 0 : index
    %82 = vector.load %arg3[%c0_33, %c0_34] : memref<4x24xf32, #tpu.memory_space<vmem>>, vector<4x24xf32>
    tpu.vector_store %arg3[%c0_33, %c0_34], %81 {strides = array<i32>} : memref<4x24xf32, #tpu.memory_space<vmem>>, vector<4x24xf32>,
    return
  }
  func.func @transform_0(%arg0: i32) -> (i32, i32) {
    %c0_i32 = arith.constant 0 : i32
    %c0_i32_0 = arith.constant 0 : i32
    return %arg0, %c0_i32 : i32, i32
  }
  func.func @transform_1(%arg0: i32) -> (i32, i32) {
    %c0_i32 = arith.constant 0 : i32
    %c0_i32_0 = arith.constant 0 : i32
    return %arg0, %c0_i32 : i32, i32
  }
  func.func @transform_2(%arg0: i32) -> (i32, i32) {
    %c0_i32 = arith.constant 0 : i32
    %c0_i32_0 = arith.constant 0 : i32
    return %arg0, %c0_i32 : i32, i32
  }
}

</mosaic_0001>

<llo_original>
// kernel: custom_scaling.1
$region0: #{custom_scaling.1}
  #allocation0 [shape = 'u32[]', space=smem, size = 0x4, offset = 0x4, fixed_abs, tag = 'smem constant byte address 0x4 - core index']
  #allocation1 [shape = 'u32[144,128]{1,0:T(1,128)}', space=vmem, size = 0x12000, scoped, tag = 'internal scratch']
  %s0 = inlined_call_operand.hbm [shape: f32[4,24], index: 0, kind: input, shape index: {}]
  %s1 = inlined_call_operand.vmem [shape: f32[4,1], index: 1, kind: output, shape index: {0}]
  %s2 = inlined_call_operand.hbm [shape: f32[4,24], index: 2, kind: output, shape index: {1}]
  %3 = xla_tuple %s1, %s2
  %s4 = sld [smem:[#allocation0]]
  $region26: #{custom_scaling.1} parent=0
    _
  %s6 = ssub.s32 1, %s4
  %s7 = scalar_select 0, %s6, %s4
  $region1: #{custom_scaling.1} parent=0
    #allocation2 [shape = 'u8[2048]{0}', space=vmem, size = 0x800, scoped, tag = 'input window, operand 0, single buffered']
    #allocation3 [shape = 's32[1]{0}', space=sflag, size = 0x4, scoped, tag = 'scoped memory for custom_scaling.1']
    #allocation4 [shape = 's32[1]{0}', space=sflag, size = 0x4, scoped, tag = 'scoped memory for custom_scaling.1']
    #allocation5 [shape = 'u8[2048]{0}', space=vmem, size = 0x800, scoped, tag = 'output window, operand 1, single buffered']
    %8 = vsyncpa [#allocation3], 0
    %9 = vsyncpa [#allocation4], 0
    // Predicated region
    $region2: #{custom_scaling.1} parent=1 // pred_check
      _
    $region3: #{custom_scaling.1} parent=1 // pred_check_branch
      %11 = sbr.rel (0) target = $region5
    $region4: #{custom_scaling.1} parent=1 // pred_region
      %s13 = ssub.s32 64, 64
      %14 = vsyncadd [#allocation3], %s13
      %s16 = sshll.u32 [#allocation2], 4
      %s17 = int_to_ptr.vmem [resolvable:$true] %s16
      %19 = dma.hbm_to_vmem [thread:$0]  %s0, 64, %s17, [#allocation3]
    $region5: #{custom_scaling.1} parent=1 // pred_fallthru
      _
    // Predicated region
    $region6: #{custom_scaling.1} parent=1 // pred_check
      _
    $region7: #{custom_scaling.1} parent=1 // pred_check_branch
      %21 = sbr.rel (0) target = $region9
    $region8: #{custom_scaling.1} parent=1 // pred_region
      %22 = dma.done [#allocation3], 64
    $region9: #{custom_scaling.1} parent=1 // pred_fallthru
      _
    %v23 = vld [vmem:[#allocation2] sm:$0xf]
    %vm24 = vcmask 191488
    %v25 = vsel %vm24, %v23, 0.0
    %26 = vadd.xlane.f32.xlu0 %v25
    %v27 = vpop.xlane.xlu0 %26
    %v28 = vadd.f32 %v27, 0.0
    %vm29 = vcmp.ne.f32.partialorder %v23, 0.0
    %v30 = vsel %vm29, 1, 0
    %v31 = vcvt.s32.f32 %v30
    %v32 = vsel %vm24, %v31, 0.0
    %33 = vadd.xlane.f32.xlu0 %v32
    %v34 = vpop.xlane.xlu0 %33
    %v35 = vadd.f32 %v34, 0.0
    %v36 = vmax.f32 %v35, 1.0
    %v37 = vrcp.pop %v36
    %v38 = vmul.f32 1.0, %v37
    %v39 = vmul.f32 %v28, %v38
    %v40 = vsub.f32 %v23, %v39
    %v41 = vmul.f32 %v40, %v40
    %v42 = vsel %vm29, %v41, 0.0
    %v43 = vsel %vm24, %v42, 0.0
    %44 = vadd.xlane.f32.xlu0 %v43
    %v45 = vpop.xlane.xlu0 %44
    %v46 = vadd.f32 %v45, 0.0
    %v47 = vmul.f32 %v46, %v38
    %v48 = vrsqrt.pop %v47
    %v49 = vmul.f32 %v47, %v48
    %vm50 = vcmp.eq.f32.partialorder %v47, inf
    %v51 = vsel %vm50, %v47, %v49
    %vm52 = vcmp.eq.f32.partialorder %v47, 0.0
    %v53 = vand.u32 %v47, 2147483648
    %v54 = vsel %vm52, %v53, %v51
    %v55 = vmul.f32 %v54, 2.0
    %v56 = vadd.f32 %v39, %v55
    %v57 = vmax.f32 %v23, 0.0
    %v58 = vmin.f32 %v57, %v56
    %v59 = vsel %vm24, %v58, 0.0
    %60 = vadd.xlane.f32.xlu0 %v59
    %v61 = vpop.xlane.xlu0 %60
    %v62 = vadd.f32 %v61, 0.0
    %vm63 = vcmp.ne.f32.partialorder %v58, 0.0
    %v64 = vsel %vm63, 1, 0
    %v65 = vcvt.s32.f32 %v64
    %v66 = vsel %vm24, %v65, 0.0
    %67 = vadd.xlane.f32.xlu0 %v66
    %v68 = vpop.xlane.xlu0 %67
    %v69 = vadd.f32 %v68, 0.0
    %v70 = vmax.f32 %v69, 1.0
    %v71 = vrcp.pop %v70
    %v72 = vmul.f32 1.0, %v71
    %v73 = vmul.f32 %v62, %v72
    %v74 = vsub.f32 %v58, %v73
    %v75 = vmul.f32 %v74, %v74
    %v76 = vsel %vm63, %v75, 0.0
    %v77 = vsel %vm24, %v76, 0.0
    %78 = vadd.xlane.f32.xlu0 %v77
    %v79 = vpop.xlane.xlu0 %78
    %v80 = vadd.f32 %v79, 0.0
    %v81 = vmul.f32 %v80, %v72
    %v82 = vrsqrt.pop %v81
    %v83 = vmul.f32 %v81, %v82
    %vm84 = vcmp.eq.f32.partialorder %v81, inf
    %v85 = vsel %vm84, %v81, %v83
    %vm86 = vcmp.eq.f32.partialorder %v81, 0.0
    %v87 = vand.u32 %v81, 2147483648
    %v88 = vsel %vm86, %v87, %v85
    %v89 = vadd.f32 %v73, %v88
    %v90 = vadd.f32 %v89, 1e-06
    %vm91 = vcmask 3072
    %92 = vst.msk [vmem:[%s1] sm:$0xf] %vm91, %v90
    %v93 = vrcp.pop %v90
    %v94 = vld [vmem:[#allocation2] sm:$0xf]
    %v95 = vmul.f32 %v94, %v93
    %v96 = vmax.f32 %v95, 0.0
    %v97 = vmin.f32 %v96, 3.0
    %98 = vst.msk [vmem:[#allocation5] sm:$0xf] %vm24, %v97
    // Predicated region
    $region10: #{custom_scaling.1} parent=1 // pred_check
      _
    $region11: #{custom_scaling.1} parent=1 // pred_check_branch
      %100 = sbr.rel (0) target = $region13
    $region12: #{custom_scaling.1} parent=1 // pred_region
      _
    $region13: #{custom_scaling.1} parent=1 // pred_fallthru
      _
    // Predicated region
    $region14: #{custom_scaling.1} parent=1 // pred_check
      _
    $region15: #{custom_scaling.1} parent=1 // pred_check_branch
      %102 = sbr.rel (0) target = $region17
    $region16: #{custom_scaling.1} parent=1 // pred_region
      %s104 = ssub.s32 64, 64
      %105 = vsyncadd [#allocation4], %s104
      %s107 = sshll.u32 [#allocation5], 4
      %s108 = int_to_ptr.vmem [resolvable:$true] %s107
      %110 = dma.vmem_to_hbm [thread:$0]  %s108, 64, %s2, [#allocation4]
    $region17: #{custom_scaling.1} parent=1 // pred_fallthru
      _
    // Predicated region
    $region18: #{custom_scaling.1} parent=1 // pred_check
      _
    $region19: #{custom_scaling.1} parent=1 // pred_check_branch
      %112 = sbr.rel (0) target = $region21
    $region20: #{custom_scaling.1} parent=1 // pred_region
      _
    $region21: #{custom_scaling.1} parent=1 // pred_fallthru
      _
    // Predicated region
    $region22: #{custom_scaling.1} parent=1 // pred_check
      _
    $region23: #{custom_scaling.1} parent=1 // pred_check_branch
      %114 = sbr.rel (0) target = $region25
    $region24: #{custom_scaling.1} parent=1 // pred_region
      %115 = dma.done [#allocation4], 64
    $region25: #{custom_scaling.1} parent=1 // pred_fallthru
      _
    %116 = vsyncpa [#allocation3], 1
    %117 = vsyncpa [#allocation4], 1

</llo_original>
